<compile_context>
chip_gen: v7x
topology: tpu7x:2x2x1
jax: 0.10.0
libtpu: 0.0.40
codegen_flags: <defaults>
</compile_context>

<pallas_src>
import jax
import jax.numpy as jnp
from jax.experimental import pallas as pl
from jax.experimental.pallas import tpu as pltpu


def _round_up(a: int, b: int) -> int:
    return (a + b - 1) // b * b


def _cdiv(a: int, b: int) -> int:
    return (a + b - 1) // b


_ROW_CHUNK = 512  # in-kernel row chunk: caps one-hot/acc temporaries


def _make_gather_kernel(num_valid_rows: int, tile_rows: int, chunk: int):
    """Kernel: out[n, :] = sum_p planes[p][clip(idx[n]), :] (one-hot MXU gather)."""
    n_chunks = tile_rows // chunk

    def kernel(idx_ref, planes_ref, out_ref):
        num_planes, v_pad, _ = planes_ref.shape
        for c in range(n_chunks):                      # static unrolled loop
            r0 = c * chunk
            idx_c = idx_ref[pl.ds(r0, chunk), :]       # (chunk, 1) int32
            # In-kernel clamp (replaces a wrapper-side XLA pass over indices).
            idx_c = jnp.clip(idx_c, 0, num_valid_rows - 1)
            onehot = (idx_c == jax.lax.broadcasted_iota(
                jnp.int32, (chunk, v_pad), 1)).astype(jnp.bfloat16)
            # DEFAULT-precision bf16 matmuls, f32 accumulation; exact because
            # the one-hot is exactly 0/1 in bf16 and each plane is bf16.
            acc = jnp.dot(onehot, planes_ref[0],
                          preferred_element_type=jnp.float32)
            for p in range(1, num_planes):
                acc = acc + jnp.dot(onehot, planes_ref[p],
                                    preferred_element_type=jnp.float32)
            out_ref[pl.ds(r0, chunk), :] = acc.astype(out_ref.dtype)

    return kernel


def _choose_tiling(n: int, tile_req: int):
    """Balanced tile count (even when >1 for v7x megacore) + chunk size."""
    tile_req = max(8, int(tile_req))
    num_tiles = _cdiv(n, tile_req)
    if num_tiles > 1 and num_tiles % 2 == 1:
        num_tiles += 1                     # balance the 2 TensorCores on v7x
    per_tile = _cdiv(n, num_tiles)
    if per_tile > _ROW_CHUNK:
        tile_rows = _round_up(per_tile, _ROW_CHUNK)
        chunk = _ROW_CHUNK
    else:
        tile_rows = _round_up(per_tile, 8)
        chunk = tile_rows
    return num_tiles, tile_rows, chunk


def _split_bf16_planes(table_f32, num_planes: int):
    """Exact residual decomposition of an f32 table into bf16 planes."""
    planes = []
    resid = table_f32
    for _ in range(num_planes):
        p = resid.astype(jnp.bfloat16)
        planes.append(p)
        resid = resid - p.astype(jnp.float32)
    return jnp.stack(planes, axis=0)       # (P, V_pad, D_pad) bf16


def atom_featurizer(x, atom_fea, *, tile_n=4096, small_n_fastpath=1024,
                    num_planes=None, keep_padded_features=False,
                    force_pallas=False):
    """JAX/Pallas equivalent of AtomFeaturizer.forward.

    x        : integer index array, arbitrary shape
    atom_fea : (V, D) float embedding table
    returns  : squeeze(atom_fea[x])  (all size-1 dims removed, like torch.squeeze)
    """
    x = jnp.asarray(x)
    V, D = atom_fea.shape
    out_dtype = atom_fea.dtype
    D_pad = _round_up(D, 128)
    V_pad = _round_up(V, 128)
    feat_out = D_pad if keep_padded_features else D

    idx_flat = jnp.reshape(x, (-1,)).astype(jnp.int32)
    N = idx_flat.shape[0]

    if N == 0:
        return jnp.squeeze(jnp.zeros(x.shape + (feat_out,), out_dtype))

    # Small-N fast path: kernel launch overhead dominates at this scale
    # (raised threshold per review; index handling matches the kernel's clamp).
    if (not force_pallas) and N < small_n_fastpath:
        out = jnp.take(atom_fea, idx_flat, axis=0, mode="clip")
        if keep_padded_features and D_pad != D:
            out = jnp.pad(out, ((0, 0), (0, D_pad - D)))
        return jnp.squeeze(out.reshape(x.shape + (feat_out,)))

    # --- table preparation: pad + split into exact bf16 planes -------------
    if num_planes is None:
        if atom_fea.dtype == jnp.bfloat16:
            num_planes = 1
        else:
            try:
                exact = bool(jnp.all(
                    atom_fea.astype(jnp.bfloat16).astype(atom_fea.dtype)
                    == atom_fea))
                num_planes = 1 if exact else 3
            except jax.errors.ConcretizationTypeError:
                num_planes = 3             # table is a tracer: be exact-safe
    num_planes = max(1, min(int(num_planes), 3))

    table_f32 = jnp.zeros((V_pad, D_pad), jnp.float32)
    table_f32 = table_f32.at[:V, :D].set(atom_fea.astype(jnp.float32))
    planes = _split_bf16_planes(table_f32, num_planes)    # (P, V_pad, D_pad)

    # --- tiling --------------------------------------------------------------
    num_tiles, tile_rows, chunk = _choose_tiling(N, tile_n)
    Np = num_tiles * tile_rows
    idx_pad = jnp.zeros((Np, 1), jnp.int32).at[:N, 0].set(idx_flat)

    kernel = _make_gather_kernel(V, tile_rows, chunk)
    out = pl.pallas_call(
        kernel,
        out_shape=jax.ShapeDtypeStruct((Np, D_pad), out_dtype),
        grid=(num_tiles,),
        in_specs=[
            # streamed index tiles (double-buffered by the Pallas pipeline)
            pl.BlockSpec((tile_rows, 1), lambda i: (i, 0)),
            # bf16 plane stack: constant index_map -> VMEM-resident across steps
            pl.BlockSpec((num_planes, V_pad, D_pad), lambda i: (0, 0, 0)),
        ],
        out_specs=pl.BlockSpec((tile_rows, D_pad), lambda i: (i, 0)),
        compiler_params=pltpu.CompilerParams(
            dimension_semantics=("parallel",),   # shard tiles over v7x's 2 TCs
            vmem_limit_bytes=48 * 1024 * 1024,   # headroom; < v7x 64 MiB physical
        ),
    )(idx_pad, planes)

    out = out[:N]
    if not keep_padded_features:
        out = out[:, :D]
    return jnp.squeeze(out.reshape(x.shape + (feat_out,)))


if __name__ == "__main__":
    key = jax.random.PRNGKey(0)
    k_table, k1, k2, k3, k4 = jax.random.split(key, 5)

    # Deterministic synthetic "atom_init.json" table: ~100 atom types,
    # 92 features (real CGCNN feature width).
    V, D = 100, 92
    atom_fea = jax.random.normal(k_table, (V, D), dtype=jnp.float32)

    def ref_fn(x, table):
        # same semantics as torch.squeeze(self.atom_fea[x.long()])
        return jnp.squeeze(jnp.take(table, x.astype(jnp.int32), axis=0))

    # 1) small batch forced through the Pallas kernel (single tile, one chunk)
    x1 = jax.random.randint(k1, (2, 8), 0, V, dtype=jnp.int32)
    out1 = jax.block_until_ready(atom_featurizer(x1, atom_fea, force_pallas=True))
    r1 = ref_fn(x1, atom_fea)
    assert out1.shape == r1.shape, (out1.shape, r1.shape)
    assert jnp.allclose(out1, r1, atol=1e-6, rtol=1e-6), "mismatch (test 1)"

    # 2) squeeze behaviour: leading size-1 dim is removed
    x2 = jax.random.randint(k2, (1, 5), 0, V, dtype=jnp.int32)
    out2 = jax.block_until_ready(atom_featurizer(x2, atom_fea, force_pallas=True))
    r2 = ref_fn(x2, atom_fea)
    assert out2.shape == (5, D), out2.shape
    assert jnp.allclose(out2, r2, atol=1e-6, rtol=1e-6), "mismatch (test 2)"

    # 3) multi-tile grid path (280 lookups, tile_n=128 -> 4 balanced tiles)
    x3 = jax.random.randint(k3, (4, 70), 0, V, dtype=jnp.int32)
    out3 = jax.block_until_ready(
        atom_featurizer(x3, atom_fea, tile_n=128, force_pallas=True))
    r3 = ref_fn(x3, atom_fea)
    assert out3.shape == r3.shape, (out3.shape, r3.shape)
    assert jnp.allclose(out3, r3, atol=1e-6, rtol=1e-6), "mismatch (test 3)"

    # 4) single tile with multiple in-kernel 512-row chunks (1200 lookups)
    x4 = jax.random.randint(k4, (3, 400), 0, V, dtype=jnp.int32)
    out4 = jax.block_until_ready(atom_featurizer(x4, atom_fea, force_pallas=True))
    r4 = ref_fn(x4, atom_fea)
    assert out4.shape == r4.shape, (out4.shape, r4.shape)
    assert jnp.allclose(out4, r4, atol=1e-6, rtol=1e-6), "mismatch (test 4)"

    # 5) real CGCNN-style 0/1 table -> auto-detected single bf16 plane, bit-exact
    table01 = (jax.random.uniform(k_table, (V, D)) > 0.5).astype(jnp.float32)
    out5 = jax.block_until_ready(atom_featurizer(x1, table01, force_pallas=True))
    r5 = ref_fn(x1, table01)
    assert out5.shape == r5.shape
    assert jnp.array_equal(out5, r5), "mismatch (test 5, exact 0/1 table)"

    # 6) default auto path (small N -> plain XLA gather fast path)
    out6 = jax.block_until_ready(atom_featurizer(x1, atom_fea))
    assert out6.shape == r1.shape
    assert jnp.allclose(out6, r1, atol=1e-6, rtol=1e-6), "mismatch (test 6)"

    print("KERNEL_OK")
</pallas_src>

<mosaic_0001>
module attributes {stable_mosaic.version = 11 : i64} {
  func.func @kernel(%arg0: i32, %arg1: memref<16x1xi32, #tpu.memory_space<vmem>>, %arg2: memref<3x128x128xbf16, #tpu.memory_space<vmem>>, %arg3: memref<16x128xf32, #tpu.memory_space<vmem>>) attributes {dimension_semantics = [#tpu.dimension_semantics<parallel>], iteration_bounds = array<i64: 1>, scalar_prefetch = 0 : i64, scratch_operands = 0 : i64, tpu.core_type = #tpu.core_type<tc>, window_params = [{transform_indices = @transform_0, window_bounds = array<i64: 16, 1>}, {pipeline_mode = #tpu.pipeline_mode<synchronous>, transform_indices = @transform_1, window_bounds = array<i64: 3, 128, 128>}, {transform_indices = @transform_2, window_bounds = array<i64: 16, 128>}]} {
    %c0 = arith.constant 0 : index
    %c0_0 = arith.constant 0 : index
    %0 = vector.load %arg1[%c0, %c0_0] : memref<16x1xi32, #tpu.memory_space<vmem>>, vector<16x1xi32>
    %c0_i32 = arith.constant 0 : i32
    %c99_i32 = arith.constant 99 : i32
    %1 = vector.broadcast %c0_i32 : i32 to vector<16x1xi32>
    %2 = arith.maxsi %1, %0 : vector<16x1xi32>
    %3 = vector.broadcast %c99_i32 : i32 to vector<16x1xi32>
    %4 = arith.minsi %3, %2 : vector<16x1xi32>
    %5 = tpu.iota {dimensions = array<i32: 1>} : vector<16x128xi32>
    %6 = vector.broadcast %4 : vector<16x1xi32> to vector<16x128xi32>
    %7 = arith.cmpi eq, %6, %5 : vector<16x128xi32>
    %8 = arith.extui %7 : vector<16x128xi1> to vector<16x128xi32>
    %9 = arith.sitofp %8 : vector<16x128xi32> to vector<16x128xf32>
    %10 = arith.truncf %9 : vector<16x128xf32> to vector<16x128xbf16>
    %c0_1 = arith.constant 0 : index
    %c0_2 = arith.constant 0 : index
    %c0_3 = arith.constant 0 : index
    %11 = vector.load %arg2[%c0_1, %c0_2, %c0_3] : memref<3x128x128xbf16, #tpu.memory_space<vmem>>, vector<1x128x128xbf16>
    %12 = vector.shape_cast %11 : vector<1x128x128xbf16> to vector<128x128xbf16>
    %cst = arith.constant dense<0.000000e+00> : vector<16x128xf32>
    %13 = tpu.matmul %10, %12, %cst {dimension_numbers = #tpu.dot_dimension_numbers<[1], [0], [0], [1], [0, 0, 1, 1], [], []>} : vector<16x128xbf16>, vector<128x128xbf16>, vector<16x128xf32> -> vector<16x128xf32>
    %c1 = arith.constant 1 : index
    %c0_4 = arith.constant 0 : index
    %c0_5 = arith.constant 0 : index
    %14 = vector.load %arg2[%c1, %c0_4, %c0_5] : memref<3x128x128xbf16, #tpu.memory_space<vmem>>, vector<1x128x128xbf16>
    %15 = vector.shape_cast %14 : vector<1x128x128xbf16> to vector<128x128xbf16>
    %cst_6 = arith.constant dense<0.000000e+00> : vector<16x128xf32>
    %16 = tpu.matmul %10, %15, %cst_6 {dimension_numbers = #tpu.dot_dimension_numbers<[1], [0], [0], [1], [0, 0, 1, 1], [], []>} : vector<16x128xbf16>, vector<128x128xbf16>, vector<16x128xf32> -> vector<16x128xf32>
    %17 = arith.addf %13, %16 : vector<16x128xf32>
    %c2 = arith.constant 2 : index
    %c0_7 = arith.constant 0 : index
    %c0_8 = arith.constant 0 : index
    %18 = vector.load %arg2[%c2, %c0_7, %c0_8] : memref<3x128x128xbf16, #tpu.memory_space<vmem>>, vector<1x128x128xbf16>
    %19 = vector.shape_cast %18 : vector<1x128x128xbf16> to vector<128x128xbf16>
    %cst_9 = arith.constant dense<0.000000e+00> : vector<16x128xf32>
    %20 = tpu.matmul %10, %19, %cst_9 {dimension_numbers = #tpu.dot_dimension_numbers<[1], [0], [0], [1], [0, 0, 1, 1], [], []>} : vector<16x128xbf16>, vector<128x128xbf16>, vector<16x128xf32> -> vector<16x128xf32>
    %21 = arith.addf %17, %20 : vector<16x128xf32>
    %c0_10 = arith.constant 0 : index
    %c0_11 = arith.constant 0 : index
    %22 = vector.load %arg3[%c0_10, %c0_11] : memref<16x128xf32, #tpu.memory_space<vmem>>, vector<16x128xf32>
    tpu.vector_store %arg3[%c0_10, %c0_11], %21 {strides = array<i32>} : memref<16x128xf32, #tpu.memory_space<vmem>>, vector<16x128xf32>,
    return
  }
  func.func @transform_0(%arg0: i32) -> (i32, i32) {
    %c0_i32 = arith.constant 0 : i32
    %c0_i32_0 = arith.constant 0 : i32
    return %arg0, %c0_i32 : i32, i32
  }
  func.func @transform_1(%arg0: i32) -> (i32, i32, i32) {
    %c0_i32 = arith.constant 0 : i32
    %c0_i32_0 = arith.constant 0 : i32
    %c0_i32_1 = arith.constant 0 : i32
    %c0_i32_2 = arith.constant 0 : i32
    return %c0_i32, %c0_i32_0, %c0_i32_1 : i32, i32, i32
  }
  func.func @transform_2(%arg0: i32) -> (i32, i32) {
    %c0_i32 = arith.constant 0 : i32
    %c0_i32_0 = arith.constant 0 : i32
    return %arg0, %c0_i32 : i32, i32
  }
}

</mosaic_0001>

<llo_original>
// kernel: tpu_custom_call.1
$region0: #{tpu_custom_call.1}
  #allocation0 [shape = 'u32[]', space=smem, size = 0x4, offset = 0x4, fixed_abs, tag = 'smem constant byte address 0x4 - core index']
  #allocation1 [shape = 'u32[144,128]{1,0:T(1,128)}', space=vmem, size = 0x12000, scoped, tag = 'internal scratch']
  %s0 = inlined_call_operand.vmem [shape: s32[16,1], index: 0, kind: input, shape index: {}]
  %s1 = inlined_call_operand.hbm [shape: bf16[3,128,128], index: 1, kind: input, shape index: {}]
  %s2 = inlined_call_operand.hbm [shape: f32[16,128], index: 2, kind: output, shape index: {}]
  %s3 = sld [smem:[#allocation0]]
  $region22: #{tpu_custom_call.1} parent=0
    _
  %s5 = ssub.s32 1, %s3
  %s6 = scalar_select 0, %s5, %s3
  $region1: #{tpu_custom_call.1} parent=0
    #allocation2 [shape = 'u8[98304]{0}', space=vmem, size = 0x18000, scoped, tag = 'input window, operand 1, single buffered']
    #allocation3 [shape = 's32[1]{0}', space=sflag, size = 0x4, scoped, tag = 'scoped memory for tpu_custom_call.1']
    #allocation4 [shape = 's32[1]{0}', space=sflag, size = 0x4, scoped, tag = 'scoped memory for tpu_custom_call.1']
    #allocation5 [shape = 'u8[8192]{0}', space=vmem, size = 0x2000, scoped, tag = 'output window, operand 0, single buffered']
    %7 = vsyncpa [#allocation3], 0
    %8 = vsyncpa [#allocation4], 0
    // Predicated region
    $region2: #{tpu_custom_call.1} parent=1 // pred_check
      _
    $region3: #{tpu_custom_call.1} parent=1 // pred_check_branch
      %10 = sbr.rel (0) target = $region5
    $region4: #{tpu_custom_call.1} parent=1 // pred_region
      _
    $region5: #{tpu_custom_call.1} parent=1 // pred_fallthru
      _
    // Predicated region
    $region6: #{tpu_custom_call.1} parent=1 // pred_check
      _
    $region7: #{tpu_custom_call.1} parent=1 // pred_check_branch
      %12 = sbr.rel (0) target = $region9
    $region8: #{tpu_custom_call.1} parent=1 // pred_region
      %s14 = ssub.s32 3072, 3072
      %15 = vsyncadd [#allocation3], %s14
      %s16 = sshll.u32 [#allocation2], 4
      %s17 = int_to_ptr.vmem [resolvable:$true] %s16
      %22 = dma.hbm_to_vmem [thread:$0]  %s1, 3072, %s17, [#allocation3], 64, 64, 4
    $region9: #{tpu_custom_call.1} parent=1 // pred_fallthru
      _
    // Predicated region
    $region10: #{tpu_custom_call.1} parent=1 // pred_check
      _
    $region11: #{tpu_custom_call.1} parent=1 // pred_check_branch
      %24 = sbr.rel (0) target = $region13
    $region12: #{tpu_custom_call.1} parent=1 // pred_region
      %25 = dma.done [#allocation3], 3072
    $region13: #{tpu_custom_call.1} parent=1 // pred_fallthru
      _
    %v27 = vld [vmem:[%s0] sm:$0xff]
    %v28 = vld [vmem:[%s0 + $0x8] sm:$0xff]
    %vm29 = vcmp.gt.s32.totalorder %v27, 0
    %v30 = vsel %vm29, %v27, 0
    %vm31 = vcmp.gt.s32.totalorder %v28, 0
    %v32 = vsel %vm31, %v28, 0
    %vm33 = vcmp.lt.s32.totalorder %v30, 99
    %v34 = vsel %vm33, %v30, 99
    %vm35 = vcmp.lt.s32.totalorder %v32, 99
    %v36 = vsel %vm35, %v32, 99
    %v37 = vlaneseq
    %v38 = vand.u32 %v37, 127
    %39 = vset.pattern.permute.xlu0 0
    %40 = vperm.xlu0 %39, %v34
    %v41 = vpop.permute.xlu0 %40
    %42 = vset.pattern.permute.xlu0 0
    %43 = vperm.xlu0 %42, %v36
    %v44 = vpop.permute.xlu0 %43
    %vm45 = vcmp.eq.s32.totalorder %v41, %v38
    %vm46 = vcmp.eq.s32.totalorder %v44, %v38
    %v47 = vsel %vm45, 1, 0
    %v48 = vsel %vm46, 1, 0
    %v49 = vcvt.s32.f32 %v47
    %v50 = vcvt.s32.f32 %v48
    %v51 = vpack.c.bf16 %v50, %v49
    %v52 = vld [vmem:[#allocation2] sm:$0xf]
    %v53 = vld [vmem:[#allocation2 + $0x4] sm:$0xf]
    %v54 = vld [vmem:[#allocation2 + $0x8] sm:$0xf]
    %v55 = vld [vmem:[#allocation2 + $0xc] sm:$0xf]
    %v56 = vld [vmem:[#allocation2 + $0x10] sm:$0xf]
    %v57 = vld [vmem:[#allocation2 + $0x14] sm:$0xf]
    %v58 = vld [vmem:[#allocation2 + $0x18] sm:$0xf]
    %v59 = vld [vmem:[#allocation2 + $0x1c] sm:$0xf]
    %v60 = vld [vmem:[#allocation2 + $0x20] sm:$0xf]
    %v61 = vld [vmem:[#allocation2 + $0x24] sm:$0xf]
    %v62 = vld [vmem:[#allocation2 + $0x28] sm:$0xf]
    %v63 = vld [vmem:[#allocation2 + $0x2c] sm:$0xf]
    %v64 = vld [vmem:[#allocation2 + $0x30] sm:$0xf]
    %v65 = vld [vmem:[#allocation2 + $0x34] sm:$0xf]
    %v66 = vld [vmem:[#allocation2 + $0x38] sm:$0xf]
    %v67 = vld [vmem:[#allocation2 + $0x3c] sm:$0xf]
    %s68 = scalar_lea.vmem [#allocation2], 64
    %v69 = vld [vmem:[%s68] sm:$0xf]
    %v70 = vld [vmem:[%s68 + $0x4] sm:$0xf]
    %v71 = vld [vmem:[%s68 + $0x8] sm:$0xf]
    %v72 = vld [vmem:[%s68 + $0xc] sm:$0xf]
    %v73 = vld [vmem:[%s68 + $0x10] sm:$0xf]
    %v74 = vld [vmem:[%s68 + $0x14] sm:$0xf]
    %v75 = vld [vmem:[%s68 + $0x18] sm:$0xf]
    %v76 = vld [vmem:[%s68 + $0x1c] sm:$0xf]
    %v77 = vld [vmem:[%s68 + $0x20] sm:$0xf]
    %v78 = vld [vmem:[%s68 + $0x24] sm:$0xf]
    %v79 = vld [vmem:[%s68 + $0x28] sm:$0xf]
    %v80 = vld [vmem:[%s68 + $0x2c] sm:$0xf]
    %v81 = vld [vmem:[%s68 + $0x30] sm:$0xf]
    %v82 = vld [vmem:[%s68 + $0x34] sm:$0xf]
    %v83 = vld [vmem:[%s68 + $0x38] sm:$0xf]
    %v84 = vld [vmem:[%s68 + $0x3c] sm:$0xf]
    %v101 = vunpack.c.l.b16 %v69
    %v102 = vunpack.c.l.b16 %v70
    %v103 = vunpack.c.l.b16 %v71
    %v104 = vunpack.c.l.b16 %v72
    %v105 = vunpack.c.l.b16 %v73
    %v106 = vunpack.c.l.b16 %v74
    %v107 = vunpack.c.l.b16 %v75
    %v108 = vunpack.c.l.b16 %v76
    %v109 = vunpack.c.l.b16 %v77
    %v110 = vunpack.c.l.b16 %v78
    %v111 = vunpack.c.l.b16 %v79
    %v112 = vunpack.c.l.b16 %v80
    %v113 = vunpack.c.l.b16 %v81
    %v114 = vunpack.c.l.b16 %v82
    %v115 = vunpack.c.l.b16 %v83
    %v116 = vunpack.c.l.b16 %v84
    %v117 = vpack.c.b16 %v102, %v101
    %v118 = vpack.c.b16 %v104, %v103
    %v119 = vpack.c.b16 %v106, %v105
    %v120 = vpack.c.b16 %v108, %v107
    %v121 = vpack.c.b16 %v110, %v109
    %v122 = vpack.c.b16 %v112, %v111
    %v123 = vpack.c.b16 %v114, %v113
    %v124 = vpack.c.b16 %v116, %v115
    %133 = vmatprep.subr.bf16.mxu0 0
    %134 = vmatpush1.bf16.msra.mxu0 %v117
    %135 = vmatprep.subr.bf16.mxu0 0
    %136 = vmatpush1.bf16.msra.mxu0 %v118
    %137 = vmatprep.subr.bf16.mxu0 0
    %138 = vmatpush1.bf16.msra.mxu0 %v119
    %139 = vmatprep.subr.bf16.mxu0 0
    %140 = vmatpush1.bf16.msra.mxu0 %v120
    %141 = vmatprep.subr.bf16.mxu0 0
    %142 = vmatpush1.bf16.msra.mxu0 %v121
    %143 = vmatprep.subr.bf16.mxu0 0
    %144 = vmatpush1.bf16.msra.mxu0 %v122
    %145 = vmatprep.subr.bf16.mxu0 0
    %146 = vmatpush1.bf16.msra.mxu0 %v123
    %147 = vmatprep.subr.bf16.mxu0 0
    %148 = vmatpush1.bf16.msra.mxu0 %v124
    %149 = vmatprep.subr.bf16.mxu0 0
    %150 = vmatpush1.bf16.msra.mxu0 0
    %151 = vmatprep.subr.bf16.mxu0 0
    %152 = vmatpush1.bf16.msra.mxu0 0
    %153 = vmatprep.subr.bf16.mxu0 0
    %154 = vmatpush1.bf16.msra.mxu0 0
    %155 = vmatprep.subr.bf16.mxu0 0
    %156 = vmatpush1.bf16.msra.mxu0 0
    %157 = vmatprep.subr.bf16.mxu0 0
    %158 = vmatpush1.bf16.msra.mxu0 0
    %159 = vmatprep.subr.bf16.mxu0 0
    %160 = vmatpush1.bf16.msra.mxu0 0
    %161 = vmatprep.subr.bf16.mxu0 0
    %162 = vmatpush1.bf16.msra.mxu0 0
    %163 = vmatprep.subr.bf16.mxu0 0
    %164 = vmatpush1.bf16.msra.mxu0 0
    %165 = vmatprep.mubr.bf16.mxu0 0
    %166 = vmatmul.mubr.bf16.gmra.mrb[0].mxu0 %v51
    %v167 = vpop.f32.mrb[0].mxu0
    %v168 = vadd.f32 0.0, %v167
    %v169 = vpop.f32.mrb[0].mxu0
    %v170 = vpop.f32.mrb[0].mxu0
    %v171 = vadd.f32 0.0, %v170
    %v172 = vpop.f32.mrb[0].mxu0
    %173 = vdwg.mxu0
    %v190 = vunpack.c.l.b16 %v52
    %v191 = vunpack.c.l.b16 %v53
    %v192 = vunpack.c.l.b16 %v54
    %v193 = vunpack.c.l.b16 %v55
    %v194 = vunpack.c.l.b16 %v56
    %v195 = vunpack.c.l.b16 %v57
    %v196 = vunpack.c.l.b16 %v58
    %v197 = vunpack.c.l.b16 %v59
    %v198 = vunpack.c.l.b16 %v60
    %v199 = vunpack.c.l.b16 %v61
    %v200 = vunpack.c.l.b16 %v62
    %v201 = vunpack.c.l.b16 %v63
    %v202 = vunpack.c.l.b16 %v64
    %v203 = vunpack.c.l.b16 %v65
    %v204 = vunpack.c.l.b16 %v66
    %v205 = vunpack.c.l.b16 %v67
    %v206 = vpack.c.b16 %v191, %v190
    %v207 = vpack.c.b16 %v193, %v192
    %v208 = vpack.c.b16 %v195, %v194
    %v209 = vpack.c.b16 %v197, %v196
    %v210 = vpack.c.b16 %v199, %v198
    %v211 = vpack.c.b16 %v201, %v200
    %v212 = vpack.c.b16 %v203, %v202
    %v213 = vpack.c.b16 %v205, %v204
    %222 = vmatprep.subr.bf16.mxu0 0
    %223 = vmatpush1.bf16.msra.mxu0 %v206
    %224 = vmatprep.subr.bf16.mxu0 0
    %225 = vmatpush1.bf16.msra.mxu0 %v207
    %226 = vmatprep.subr.bf16.mxu0 0
    %227 = vmatpush1.bf16.msra.mxu0 %v208
    %228 = vmatprep.subr.bf16.mxu0 0
    %229 = vmatpush1.bf16.msra.mxu0 %v209
    %230 = vmatprep.subr.bf16.mxu0 0
    %231 = vmatpush1.bf16.msra.mxu0 %v210
    %232 = vmatprep.subr.bf16.mxu0 0
    %233 = vmatpush1.bf16.msra.mxu0 %v211
    %234 = vmatprep.subr.bf16.mxu0 0
    %235 = vmatpush1.bf16.msra.mxu0 %v212
    %236 = vmatprep.subr.bf16.mxu0 0
    %237 = vmatpush1.bf16.msra.mxu0 %v213
    %238 = vmatprep.subr.bf16.mxu0 0
    %239 = vmatpush1.bf16.msra.mxu0 0
    %240 = vmatprep.subr.bf16.mxu0 0
    %241 = vmatpush1.bf16.msra.mxu0 0
    %242 = vmatprep.subr.bf16.mxu0 0
    %243 = vmatpush1.bf16.msra.mxu0 0
    %244 = vmatprep.subr.bf16.mxu0 0
    %245 = vmatpush1.bf16.msra.mxu0 0
    %246 = vmatprep.subr.bf16.mxu0 0
    %247 = vmatpush1.bf16.msra.mxu0 0
    %248 = vmatprep.subr.bf16.mxu0 0
    %249 = vmatpush1.bf16.msra.mxu0 0
    %250 = vmatprep.subr.bf16.mxu0 0
    %251 = vmatpush1.bf16.msra.mxu0 0
    %252 = vmatprep.subr.bf16.mxu0 0
    %253 = vmatpush1.bf16.msra.mxu0 0
    %254 = vmatprep.mubr.bf16.mxu0 0
    %255 = vmatmul.mubr.bf16.gmra.mrb[0].mxu0 %v51
    %v256 = vpop.f32.mrb[0].mxu0
    %v257 = vadd.f32 %v168, %v256
    %v258 = vpop.f32.mrb[0].mxu0
    %v259 = vpop.f32.mrb[0].mxu0
    %v260 = vadd.f32 %v171, %v259
    %v261 = vpop.f32.mrb[0].mxu0
    %262 = vdwg.mxu0
    %s263 = scalar_lea.vmem [#allocation2], 128
    %v264 = vld [vmem:[%s263] sm:$0xf]
    %v265 = vld [vmem:[%s263 + $0x4] sm:$0xf]
    %v266 = vld [vmem:[%s263 + $0x8] sm:$0xf]
    %v267 = vld [vmem:[%s263 + $0xc] sm:$0xf]
    %v268 = vld [vmem:[%s263 + $0x10] sm:$0xf]
    %v269 = vld [vmem:[%s263 + $0x14] sm:$0xf]
    %v270 = vld [vmem:[%s263 + $0x18] sm:$0xf]
    %v271 = vld [vmem:[%s263 + $0x1c] sm:$0xf]
    %v272 = vld [vmem:[%s263 + $0x20] sm:$0xf]
    %v273 = vld [vmem:[%s263 + $0x24] sm:$0xf]
    %v274 = vld [vmem:[%s263 + $0x28] sm:$0xf]
    %v275 = vld [vmem:[%s263 + $0x2c] sm:$0xf]
    %v276 = vld [vmem:[%s263 + $0x30] sm:$0xf]
    %v277 = vld [vmem:[%s263 + $0x34] sm:$0xf]
    %v278 = vld [vmem:[%s263 + $0x38] sm:$0xf]
    %v279 = vld [vmem:[%s263 + $0x3c] sm:$0xf]
    %v296 = vunpack.c.l.b16 %v264
    %v297 = vunpack.c.l.b16 %v265
    %v298 = vunpack.c.l.b16 %v266
    %v299 = vunpack.c.l.b16 %v267
    %v300 = vunpack.c.l.b16 %v268
    %v301 = vunpack.c.l.b16 %v269
    %v302 = vunpack.c.l.b16 %v270
    %v303 = vunpack.c.l.b16 %v271
    %v304 = vunpack.c.l.b16 %v272
    %v305 = vunpack.c.l.b16 %v273
    %v306 = vunpack.c.l.b16 %v274
    %v307 = vunpack.c.l.b16 %v275
    %v308 = vunpack.c.l.b16 %v276
    %v309 = vunpack.c.l.b16 %v277
    %v310 = vunpack.c.l.b16 %v278
    %v311 = vunpack.c.l.b16 %v279
    %v312 = vpack.c.b16 %v297, %v296
    %v313 = vpack.c.b16 %v299, %v298
    %v314 = vpack.c.b16 %v301, %v300
    %v315 = vpack.c.b16 %v303, %v302
    %v316 = vpack.c.b16 %v305, %v304
    %v317 = vpack.c.b16 %v307, %v306
    %v318 = vpack.c.b16 %v309, %v308
    %v319 = vpack.c.b16 %v311, %v310
    %328 = vmatprep.subr.bf16.mxu0 0
    %329 = vmatpush1.bf16.msra.mxu0 %v312
    %330 = vmatprep.subr.bf16.mxu0 0
    %331 = vmatpush1.bf16.msra.mxu0 %v313
    %332 = vmatprep.subr.bf16.mxu0 0
    %333 = vmatpush1.bf16.msra.mxu0 %v314
    %334 = vmatprep.subr.bf16.mxu0 0
    %335 = vmatpush1.bf16.msra.mxu0 %v315
    %336 = vmatprep.subr.bf16.mxu0 0
    %337 = vmatpush1.bf16.msra.mxu0 %v316
    %338 = vmatprep.subr.bf16.mxu0 0
    %339 = vmatpush1.bf16.msra.mxu0 %v317
    %340 = vmatprep.subr.bf16.mxu0 0
    %341 = vmatpush1.bf16.msra.mxu0 %v318
    %342 = vmatprep.subr.bf16.mxu0 0
    %343 = vmatpush1.bf16.msra.mxu0 %v319
    %344 = vmatprep.subr.bf16.mxu0 0
    %345 = vmatpush1.bf16.msra.mxu0 0
    %346 = vmatprep.subr.bf16.mxu0 0
    %347 = vmatpush1.bf16.msra.mxu0 0
    %348 = vmatprep.subr.bf16.mxu0 0
    %349 = vmatpush1.bf16.msra.mxu0 0
    %350 = vmatprep.subr.bf16.mxu0 0
    %351 = vmatpush1.bf16.msra.mxu0 0
    %352 = vmatprep.subr.bf16.mxu0 0
    %353 = vmatpush1.bf16.msra.mxu0 0
    %354 = vmatprep.subr.bf16.mxu0 0
    %355 = vmatpush1.bf16.msra.mxu0 0
    %356 = vmatprep.subr.bf16.mxu0 0
    %357 = vmatpush1.bf16.msra.mxu0 0
    %358 = vmatprep.subr.bf16.mxu0 0
    %359 = vmatpush1.bf16.msra.mxu0 0
    %360 = vmatprep.mubr.bf16.mxu0 0
    %361 = vmatmul.mubr.bf16.gmra.mrb[0].mxu0 %v51
    %v362 = vpop.f32.mrb[0].mxu0
    %v363 = vadd.f32 0.0, %v362
    %v364 = vpop.f32.mrb[0].mxu0
    %v365 = vpop.f32.mrb[0].mxu0
    %v366 = vadd.f32 0.0, %v365
    %v367 = vpop.f32.mrb[0].mxu0
    %368 = vdwg.mxu0
    %v369 = vadd.f32 %v257, %v363
    %v370 = vadd.f32 %v260, %v366
    %371 = vst [vmem:[#allocation5] sm:$0xff] %v369
    %372 = vst [vmem:[#allocation5 + $0x8] sm:$0xff] %v370
    // Predicated region
    $region14: #{tpu_custom_call.1} parent=1 // pred_check
      _
    $region15: #{tpu_custom_call.1} parent=1 // pred_check_branch
      %374 = sbr.rel (0) target = $region17
    $region16: #{tpu_custom_call.1} parent=1 // pred_region
      %s376 = ssub.s32 256, 256
      %377 = vsyncadd [#allocation4], %s376
      %s378 = sshll.u32 [#allocation5], 4
      %s379 = int_to_ptr.vmem [resolvable:$true] %s378
      %384 = dma.vmem_to_hbm [thread:$0]  %s379, 256, %s2, [#allocation4], 128, 128, 8
    $region17: #{tpu_custom_call.1} parent=1 // pred_fallthru
      _
    // Predicated region
    $region18: #{tpu_custom_call.1} parent=1 // pred_check
      _
    $region19: #{tpu_custom_call.1} parent=1 // pred_check_branch
      %386 = sbr.rel (0) target = $region21
    $region20: #{tpu_custom_call.1} parent=1 // pred_region
      %387 = dma.done [#allocation4], 256
    $region21: #{tpu_custom_call.1} parent=1 // pred_fallthru
      _
    %388 = vsyncpa [#allocation3], 1
    %389 = vsyncpa [#allocation4], 1

</llo_original>
